<compile_context>
chip_gen: v5e
topology: v5e:2x2
jax: 0.10.0
libtpu: 0.0.40
codegen_flags: <defaults>
</compile_context>

<pallas_src>
import jax
import jax.numpy as jnp
from jax import lax
from jax.experimental import pallas as pl
from jax.experimental.pallas import tpu as pltpu


# Contract last dim of A[M,K] with last dim of B[N,K] -> [M,N]  (A @ B.T without a transpose)
_CONTRACT_LAST = (((1,), (1,)), ((), ()))

_VMEM_TILE_BUDGET = 40 * 1024 * 1024   # double-buffered tile footprint budget (safe on v7x)
_VMEM_LIMIT_CAP = 48 * 1024 * 1024     # never request the whole physical VMEM


def _edge_weight_kernel_1k(w_ref, a_ref, b_ref, o_ref):
    """Single k-step: the whole feature dim fits in one tile."""
    # w_ref : SMEM (1,) scalar weight
    # a_ref : VMEM (tm, D) tile of nodes (rows i)
    # b_ref : VMEM (tn, D) tile of nodes (rows j)
    # o_ref : VMEM (tm, tn) output tile
    g = lax.dot_general(
        a_ref[...], b_ref[...],
        dimension_numbers=_CONTRACT_LAST,
        preferred_element_type=jnp.float32,
    )
    o_ref[...] = (g * w_ref[0]).astype(o_ref.dtype)


def _edge_weight_kernel_nk_f32(w_ref, a_ref, b_ref, o_ref):
    """Multi k-step, f32 output: accumulate directly into the resident output tile."""
    k = pl.program_id(2)

    @pl.when(k == 0)
    def _():
        o_ref[...] = jnp.zeros_like(o_ref)

    o_ref[...] += lax.dot_general(
        a_ref[...], b_ref[...],
        dimension_numbers=_CONTRACT_LAST,
        preferred_element_type=jnp.float32,
    )

    @pl.when(k == pl.num_programs(2) - 1)
    def _():
        o_ref[...] = o_ref[...] * w_ref[0]


def _edge_weight_kernel_nk_scratch(w_ref, a_ref, b_ref, o_ref, acc_ref):
    """Multi k-step, low-precision output: accumulate in an f32 scratch."""
    k = pl.program_id(2)

    @pl.when(k == 0)
    def _():
        acc_ref[...] = jnp.zeros_like(acc_ref)

    acc_ref[...] += lax.dot_general(
        a_ref[...], b_ref[...],
        dimension_numbers=_CONTRACT_LAST,
        preferred_element_type=jnp.float32,
    )

    @pl.when(k == pl.num_programs(2) - 1)
    def _():
        o_ref[...] = (acc_ref[...] * w_ref[0]).astype(o_ref.dtype)


def _num_tensorcores_per_chip():
    """Best-effort detection: 2 TCs per chip on v7x, 1 on v5e/v6e (safe fallback)."""
    try:
        kind = jax.devices()[0].device_kind.lower()
        if "v7" in kind:
            return 2
    except Exception:
        pass
    return 1


def _round_up(x, m):
    return ((x + m - 1) // m) * m


def _pick_tile(dim, candidates, min_blocks=1):
    """Largest candidate dividing `dim`; optionally require >= min_blocks blocks."""
    if min_blocks > 1:
        for c in candidates:
            if dim % c == 0 and dim // c >= min_blocks:
                return c
    for c in candidates:
        if dim % c == 0:
            return c
    return dim  # full extent — always a legal block shape


def edge_weight_computation(nodes, edges, weight, *, tm=None, tn=None, tk=None):
    """Pallas implementation of EdgeWeightComputation.forward.

    nodes : [N, D]
    edges : unused (kept to mirror the PyTorch signature)
    weight: scalar parameter (shape (), (1,), or python float)
    returns [N, N] in nodes.dtype
    """
    del edges  # forward() never uses it
    N, D = nodes.shape
    out_dtype = nodes.dtype
    in_isz = jnp.dtype(nodes.dtype).itemsize
    out_isz = jnp.dtype(out_dtype).itemsize

    # ---- pad N (and, only if K must be tiled, D) to TPU-friendly sizes ----
    # Zero-padded rows/features do not change the Gram matrix; result is sliced back.
    N_p = max(_round_up(N, 128), 128)

    if tk is None:
        if D <= 1024:
            tk = D           # collapse the reduction axis; full-extent K block is legal
            D_p = D
        else:
            tk = _pick_tile(D, (1024, 512, 256))
            if D % tk != 0:  # fall back to zero-padding the feature dim
                tk = 512
                D_p = _round_up(D, tk)
            else:
                D_p = D
    else:
        D_p = _round_up(D, tk)

    # ---- tile picking ----
    num_tc = _num_tensorcores_per_chip()
    if tm is None:
        # Only on multi-TC chips insist on >= 2 blocks along the outer parallel axis;
        # single-TC v5e/v6e just take the largest dividing tile.
        tm = _pick_tile(N_p, (1024, 512, 256, 128), min_blocks=num_tc)
    if tn is None:
        # Keep the output last dim as wide as possible: lane-dense unmasked stores,
        # fewer grid steps, fewer A re-reads.
        tn = _pick_tile(N_p, (2048, 1024, 512, 256, 128))

    assert N_p % tm == 0 and N_p % tn == 0 and D_p % tk == 0, "explicit tile override must divide"

    needs_scratch = (D_p // tk > 1) and jnp.dtype(out_dtype) != jnp.float32

    def footprint(tm_, tn_):
        b = 2 * (tm_ * tk + tn_ * tk) * in_isz + 2 * tm_ * tn_ * out_isz
        if needs_scratch:
            b += tm_ * tn_ * 4
        return b

    # Shrink tiles (tn first) until the double-buffered footprint fits the budget.
    while footprint(tm, tn) > _VMEM_TILE_BUDGET:
        if tn >= tm and tn > 128:
            tn //= 2
        elif tm > 128:
            tm //= 2
        else:
            break

    fp = footprint(tm, tn)
    vmem_limit = int(min(max(fp + (8 << 20), 16 << 20), _VMEM_LIMIT_CAP))

    nodes_p = nodes
    if N_p != N or D_p != D:
        nodes_p = jnp.pad(nodes, ((0, N_p - N), (0, D_p - D)))

    k_steps = D_p // tk
    w_smem = jnp.asarray(weight, jnp.float32).reshape(1)
    w_spec = pl.BlockSpec(memory_space=pltpu.MemorySpace.SMEM)

    if k_steps == 1:
        grid = (N_p // tm, N_p // tn)
        in_specs = [
            w_spec,
            pl.BlockSpec((tm, tk), lambda i, j: (i, 0)),
            pl.BlockSpec((tn, tk), lambda i, j: (j, 0)),
        ]
        out_specs = pl.BlockSpec((tm, tn), lambda i, j: (i, j))
        kernel = _edge_weight_kernel_1k
        scratch_shapes = []
        semantics = ("parallel", "parallel")
    else:
        grid = (N_p // tm, N_p // tn, k_steps)
        in_specs = [
            w_spec,
            pl.BlockSpec((tm, tk), lambda i, j, k: (i, k)),
            # NOTE: if profiling shows exposed DMA on the B stream, add
            # pipeline_mode=pl.Buffered(3) to this spec.
            pl.BlockSpec((tn, tk), lambda i, j, k: (j, k)),
        ]
        out_specs = pl.BlockSpec((tm, tn), lambda i, j, k: (i, j))
        if jnp.dtype(out_dtype) == jnp.float32:
            kernel = _edge_weight_kernel_nk_f32
            scratch_shapes = []
        else:
            kernel = _edge_weight_kernel_nk_scratch
            scratch_shapes = [pltpu.VMEM((tm, tn), jnp.float32)]
        semantics = ("parallel", "parallel", "arbitrary")

    out_p = pl.pallas_call(
        kernel,
        out_shape=jax.ShapeDtypeStruct((N_p, N_p), out_dtype),
        grid_spec=pltpu.PrefetchScalarGridSpec(
            num_scalar_prefetch=0,
            grid=grid,
            in_specs=in_specs,
            out_specs=out_specs,
            scratch_shapes=scratch_shapes,
        ),
        compiler_params=pltpu.CompilerParams(
            dimension_semantics=semantics,
            vmem_limit_bytes=vmem_limit,
        ),
    )(w_smem, nodes_p, nodes_p)

    if N_p != N:
        out_p = out_p[:N, :N]
    return out_p


if __name__ == "__main__":
    key = jax.random.PRNGKey(0)
    k_nodes, k_edges = jax.random.split(key)

    N, D = 256, 128
    nodes = jax.random.normal(k_nodes, (N, D), dtype=jnp.float32)
    edges = jax.random.normal(k_edges, (N, N), dtype=jnp.float32)  # unused by forward

    # nn.Parameter(torch.Tensor(1)) is uninitialized memory in PyTorch;
    # use a fixed deterministic value here.
    weight = jnp.array(0.5, dtype=jnp.float32)

    out = edge_weight_computation(nodes, edges, weight)
    out = jax.block_until_ready(out)

    ref = jnp.matmul(nodes, nodes.T, precision=jax.lax.Precision.HIGHEST) * weight
    assert out.shape == (N, N)
    assert jnp.allclose(out, ref, atol=1e-2, rtol=1e-2), "mismatch vs reference"

    print("KERNEL_OK")
</pallas_src>

<mosaic_0001>
module attributes {stable_mosaic.version = 11 : i64} {
  func.func @_edge_weight_kernel_1k(%arg0: i32, %arg1: i32, %arg2: memref<1xf32, #tpu.memory_space<smem>>, %arg3: memref<256x128xf32, #tpu.memory_space<vmem>>, %arg4: memref<256x128xf32, #tpu.memory_space<vmem>>, %arg5: memref<256x256xf32, #tpu.memory_space<vmem>>) attributes {dimension_semantics = [#tpu.dimension_semantics<parallel>, #tpu.dimension_semantics<parallel>], iteration_bounds = array<i64: 1, 1>, scalar_prefetch = 0 : i64, scratch_operands = 0 : i64, tpu.core_type = #tpu.core_type<tc>, window_params = [{transform_indices = @transform_0, window_bounds = array<i64: 1>}, {transform_indices = @transform_1, window_bounds = array<i64: 256, 128>}, {transform_indices = @transform_2, window_bounds = array<i64: 256, 128>}, {transform_indices = @transform_3, window_bounds = array<i64: 256, 256>}]} {
    %c0 = arith.constant 0 : index
    %c0_0 = arith.constant 0 : index
    %0 = vector.load %arg3[%c0, %c0_0] : memref<256x128xf32, #tpu.memory_space<vmem>>, vector<256x128xf32>
    %c0_1 = arith.constant 0 : index
    %c0_2 = arith.constant 0 : index
    %1 = vector.load %arg4[%c0_1, %c0_2] : memref<256x128xf32, #tpu.memory_space<vmem>>, vector<256x128xf32>
    %cst = arith.constant dense<0.000000e+00> : vector<256x256xf32>
    %2 = tpu.matmul %0, %1, %cst {dimension_numbers = #tpu.dot_dimension_numbers<[1], [1], [0], [0], [0, 0, 1, 0], [], []>} : vector<256x128xf32>, vector<256x128xf32>, vector<256x256xf32> -> vector<256x256xf32>
    %c0_3 = arith.constant 0 : index
    %3 = memref.load %arg2[%c0_3] : memref<1xf32, #tpu.memory_space<smem>>
    %4 = vector.broadcast %3 : f32 to vector<256x256xf32>
    %5 = arith.mulf %2, %4 : vector<256x256xf32>
    %c0_4 = arith.constant 0 : index
    %c0_5 = arith.constant 0 : index
    %6 = vector.load %arg5[%c0_4, %c0_5] : memref<256x256xf32, #tpu.memory_space<vmem>>, vector<256x256xf32>
    tpu.vector_store %arg5[%c0_4, %c0_5], %5 {strides = array<i32>} : memref<256x256xf32, #tpu.memory_space<vmem>>, vector<256x256xf32>,
    return
  }
  func.func @transform_0(%arg0: i32, %arg1: i32) -> i32 {
    %c0_i32 = arith.constant 0 : i32
    %c0_i32_0 = arith.constant 0 : i32
    return %c0_i32 : i32
  }
  func.func @transform_1(%arg0: i32, %arg1: i32) -> (i32, i32) {
    %c0_i32 = arith.constant 0 : i32
    %c0_i32_0 = arith.constant 0 : i32
    return %arg0, %c0_i32 : i32, i32
  }
  func.func @transform_2(%arg0: i32, %arg1: i32) -> (i32, i32) {
    %c0_i32 = arith.constant 0 : i32
    %c0_i32_0 = arith.constant 0 : i32
    return %arg1, %c0_i32 : i32, i32
  }
  func.func @transform_3(%arg0: i32, %arg1: i32) -> (i32, i32) {
    %c0_i32 = arith.constant 0 : i32
    return %arg0, %arg1 : i32, i32
  }
}

</mosaic_0001>

<llo_original>
// kernel: tpu_custom_call.1
$region0: #{tpu_custom_call.1}
  #allocation0 [shape = 'u32[]', space=smem, size = 0x4, offset = 0x4, fixed_abs, tag = 'smem constant byte address 0x4 - core index']
  #allocation1 [shape = 'u32[72,128]{1,0:T(1,128)}', space=vmem, size = 0x9000, scoped, tag = 'internal scratch']
  #allocation2 [shape = 'f32[1]{0:T(128)S(6)}', space=smem, size = 0x200, scoped, tag = 'scoped memory for tpu_custom_call.1']
  %s0 = inlined_call_operand.<no memory space> [shape: f32[1], index: 0, kind: input, shape index: {}]
  %s1 = inlined_call_operand.hbm [shape: f32[256,128], index: 1, kind: input, shape index: {}]
  %s2 = inlined_call_operand.hbm [shape: f32[256,128], index: 2, kind: input, shape index: {}]
  %s3 = inlined_call_operand.hbm [shape: f32[256,256], index: 3, kind: output, shape index: {}]
  %s4 = sld [smem:[#allocation0]]
  $region30: #{tpu_custom_call.1} parent=0
    _
  %s6 = ssub.s32 1, %s4
  %s7 = scalar_select 0, %s6, %s4
  %8 = sst [smem:[#allocation2]] %s0
  $region1: #{tpu_custom_call.1} parent=0
    #allocation3 [shape = 'u8[131072]{0}', space=vmem, size = 0x20000, scoped, tag = 'input window, operand 1, single buffered']
    #allocation4 [shape = 's32[1]{0}', space=sflag, size = 0x4, scoped, tag = 'scoped memory for tpu_custom_call.1']
    #allocation5 [shape = 's32[1]{0}', space=sflag, size = 0x4, scoped, tag = 'scoped memory for tpu_custom_call.1']
    #allocation6 [shape = 'u8[131072]{0}', space=vmem, size = 0x20000, scoped, tag = 'input window, operand 2, single buffered']
    #allocation7 [shape = 's32[1]{0}', space=sflag, size = 0x4, scoped, tag = 'scoped memory for tpu_custom_call.1']
    #allocation8 [shape = 'u8[262144]{0}', space=vmem, size = 0x40000, scoped, tag = 'output window, operand 0, single buffered']
    %9 = vsyncpa [#allocation4], 0
    %10 = vsyncpa [#allocation7], 0
    %11 = vsyncpa [#allocation5], 0
    // Predicated region
    $region2: #{tpu_custom_call.1} parent=1 // pred_check
      _
    $region3: #{tpu_custom_call.1} parent=1 // pred_check_branch
      %13 = sbr.rel (0) target = $region5
    $region4: #{tpu_custom_call.1} parent=1 // pred_region
      _
    $region5: #{tpu_custom_call.1} parent=1 // pred_fallthru
      _
    // Predicated region
    $region6: #{tpu_custom_call.1} parent=1 // pred_check
      _
    $region7: #{tpu_custom_call.1} parent=1 // pred_check_branch
      %15 = sbr.rel (0) target = $region9
    $region8: #{tpu_custom_call.1} parent=1 // pred_region
      %17 = vsyncadd [#allocation4], 0
      %s18 = sshll.u32 %s1, 4
      %s19 = int_to_ptr.hbm [resolvable:$true] %s18
      %s20 = sshll.u32 [#allocation3], 4
      %s21 = int_to_ptr.vmem [resolvable:$true] %s20
      %26 = dma.hbm_to_vmem [thread:$0]  %s19, 4096, %s21, [#allocation4], 128, 128, 8
    $region9: #{tpu_custom_call.1} parent=1 // pred_fallthru
      _
    // Predicated region
    $region10: #{tpu_custom_call.1} parent=1 // pred_check
      _
    $region11: #{tpu_custom_call.1} parent=1 // pred_check_branch
      %28 = sbr.rel (0) target = $region13
    $region12: #{tpu_custom_call.1} parent=1 // pred_region
      %30 = vsyncadd [#allocation7], 0
      %s31 = sshll.u32 %s2, 4
      %s32 = int_to_ptr.hbm [resolvable:$true] %s31
      %s33 = sshll.u32 [#allocation6], 4
      %s34 = int_to_ptr.vmem [resolvable:$true] %s33
      %39 = dma.hbm_to_vmem [thread:$0]  %s32, 4096, %s34, [#allocation7], 128, 128, 8
    $region13: #{tpu_custom_call.1} parent=1 // pred_fallthru
      _
    // Predicated region
    $region14: #{tpu_custom_call.1} parent=1 // pred_check
      _
    $region15: #{tpu_custom_call.1} parent=1 // pred_check_branch
      %41 = sbr.rel (0) target = $region17
    $region16: #{tpu_custom_call.1} parent=1 // pred_region
      %43 = dma.done [#allocation4], 4096
    $region17: #{tpu_custom_call.1} parent=1 // pred_fallthru
      _
    // Predicated region
    $region18: #{tpu_custom_call.1} parent=1 // pred_check
      _
    $region19: #{tpu_custom_call.1} parent=1 // pred_check_branch
      %45 = sbr.rel (0) target = $region21
    $region20: #{tpu_custom_call.1} parent=1 // pred_region
      %47 = dma.done [#allocation7], 4096
    $region21: #{tpu_custom_call.1} parent=1 // pred_fallthru
      _
    %v48 = vld [vmem:[#allocation3] sm:$0xff]
    %v49 = vld [vmem:[#allocation3 + $0x8] sm:$0xff]
    %v50 = vld [vmem:[#allocation3 + $0x10] sm:$0xff]
    %v51 = vld [vmem:[#allocation3 + $0x18] sm:$0xff]
    %v52 = vld [vmem:[#allocation3 + $0x20] sm:$0xff]
    %v53 = vld [vmem:[#allocation3 + $0x28] sm:$0xff]
    %v54 = vld [vmem:[#allocation3 + $0x30] sm:$0xff]
    %v55 = vld [vmem:[#allocation3 + $0x38] sm:$0xff]
    %v56 = vld [vmem:[#allocation3 + $0x40] sm:$0xff]
    %v57 = vld [vmem:[#allocation3 + $0x48] sm:$0xff]
    %v58 = vld [vmem:[#allocation3 + $0x50] sm:$0xff]
    %v59 = vld [vmem:[#allocation3 + $0x58] sm:$0xff]
    %v60 = vld [vmem:[#allocation3 + $0x60] sm:$0xff]
    %v61 = vld [vmem:[#allocation3 + $0x68] sm:$0xff]
    %v62 = vld [vmem:[#allocation3 + $0x70] sm:$0xff]
    %v63 = vld [vmem:[#allocation3 + $0x78] sm:$0xff]
    %v64 = vld [vmem:[#allocation3 + $0x80] sm:$0xff]
    %v65 = vld [vmem:[#allocation3 + $0x88] sm:$0xff]
    %v66 = vld [vmem:[#allocation3 + $0x90] sm:$0xff]
    %v67 = vld [vmem:[#allocation3 + $0x98] sm:$0xff]
    %v68 = vld [vmem:[#allocation3 + $0xa0] sm:$0xff]
    %v69 = vld [vmem:[#allocation3 + $0xa8] sm:$0xff]
    %v70 = vld [vmem:[#allocation3 + $0xb0] sm:$0xff]
    %v71 = vld [vmem:[#allocation3 + $0xb8] sm:$0xff]
    %v72 = vld [vmem:[#allocation3 + $0xc0] sm:$0xff]
    %v73 = vld [vmem:[#allocation3 + $0xc8] sm:$0xff]
    %v74 = vld [vmem:[#allocation3 + $0xd0] sm:$0xff]
    %v75 = vld [vmem:[#allocation3 + $0xd8] sm:$0xff]
    %v76 = vld [vmem:[#allocation3 + $0xe0] sm:$0xff]
    %v77 = vld [vmem:[#allocation3 + $0xe8] sm:$0xff]
    %v78 = vld [vmem:[#allocation3 + $0xf0] sm:$0xff]
    %v79 = vld [vmem:[#allocation3 + $0xf8] sm:$0xff]
    %v80 = vld [vmem:[#allocation6] sm:$0xff]
    %v81 = vld [vmem:[#allocation6 + $0x8] sm:$0xff]
    %v82 = vld [vmem:[#allocation6 + $0x10] sm:$0xff]
    %v83 = vld [vmem:[#allocation6 + $0x18] sm:$0xff]
    %v84 = vld [vmem:[#allocation6 + $0x20] sm:$0xff]
    %v85 = vld [vmem:[#allocation6 + $0x28] sm:$0xff]
    %v86 = vld [vmem:[#allocation6 + $0x30] sm:$0xff]
    %v87 = vld [vmem:[#allocation6 + $0x38] sm:$0xff]
    %v88 = vld [vmem:[#allocation6 + $0x40] sm:$0xff]
    %v89 = vld [vmem:[#allocation6 + $0x48] sm:$0xff]
    %v90 = vld [vmem:[#allocation6 + $0x50] sm:$0xff]
    %v91 = vld [vmem:[#allocation6 + $0x58] sm:$0xff]
    %v92 = vld [vmem:[#allocation6 + $0x60] sm:$0xff]
    %v93 = vld [vmem:[#allocation6 + $0x68] sm:$0xff]
    %v94 = vld [vmem:[#allocation6 + $0x70] sm:$0xff]
    %v95 = vld [vmem:[#allocation6 + $0x78] sm:$0xff]
    %v96 = vld [vmem:[#allocation6 + $0x80] sm:$0xff]
    %v97 = vld [vmem:[#allocation6 + $0x88] sm:$0xff]
    %v98 = vld [vmem:[#allocation6 + $0x90] sm:$0xff]
    %v99 = vld [vmem:[#allocation6 + $0x98] sm:$0xff]
    %v100 = vld [vmem:[#allocation6 + $0xa0] sm:$0xff]
    %v101 = vld [vmem:[#allocation6 + $0xa8] sm:$0xff]
    %v102 = vld [vmem:[#allocation6 + $0xb0] sm:$0xff]
    %v103 = vld [vmem:[#allocation6 + $0xb8] sm:$0xff]
    %v104 = vld [vmem:[#allocation6 + $0xc0] sm:$0xff]
    %v105 = vld [vmem:[#allocation6 + $0xc8] sm:$0xff]
    %v106 = vld [vmem:[#allocation6 + $0xd0] sm:$0xff]
    %v107 = vld [vmem:[#allocation6 + $0xd8] sm:$0xff]
    %v108 = vld [vmem:[#allocation6 + $0xe0] sm:$0xff]
    %v109 = vld [vmem:[#allocation6 + $0xe8] sm:$0xff]
    %v110 = vld [vmem:[#allocation6 + $0xf0] sm:$0xff]
    %v111 = vld [vmem:[#allocation6 + $0xf8] sm:$0xff]
    %112 = vmatpush.xpose.msra.mxu0 %v95
    %113 = vmatpush.xpose.msra.mxu0 %v94
    %114 = vmatpush.xpose.msra.mxu0 %v93
    %115 = vmatpush.xpose.msra.mxu0 %v92
    %116 = vmatpush.xpose.msra.mxu0 %v91
    %117 = vmatpush.xpose.msra.mxu0 %v90
    %118 = vmatpush.xpose.msra.mxu0 %v89
    %119 = vmatpush.xpose.msra.mxu0 %v88
    %120 = vmatpush.xpose.msra.mxu0 %v87
    %121 = vmatpush.xpose.msra.mxu0 %v86
    %122 = vmatpush.xpose.msra.mxu0 %v85
    %123 = vmatpush.xpose.msra.mxu0 %v84
    %124 = vmatpush.xpose.msra.mxu0 %v83
    %125 = vmatpush.xpose.msra.mxu0 %v82
    %126 = vmatpush.xpose.msra.mxu0 %v81
    %127 = vmatpush.xpose.msra.mxu0 %v80
    %128 = vmatmul.f32.gmra.mxu0 %v48
    %v129 = vpop.f32.mrf.mxu0
    %v130 = vadd.f32 0.0, %v129
    %131 = vmatmul.f32.gmra.mxu0 %v49
    %v132 = vpop.f32.mrf.mxu0
    %v133 = vadd.f32 0.0, %v132
    %134 = vmatmul.f32.gmra.mxu0 %v50
    %v135 = vpop.f32.mrf.mxu0
    %v136 = vadd.f32 0.0, %v135
    %137 = vmatmul.f32.gmra.mxu0 %v51
    %v138 = vpop.f32.mrf.mxu0
    %v139 = vadd.f32 0.0, %v138
    %140 = vmatmul.f32.gmra.mxu0 %v52
    %v141 = vpop.f32.mrf.mxu0
    %v142 = vadd.f32 0.0, %v141
    %143 = vmatmul.f32.gmra.mxu0 %v53
    %v144 = vpop.f32.mrf.mxu0
    %v145 = vadd.f32 0.0, %v144
    %146 = vmatmul.f32.gmra.mxu0 %v54
    %v147 = vpop.f32.mrf.mxu0
    %v148 = vadd.f32 0.0, %v147
    %149 = vmatmul.f32.gmra.mxu0 %v55
    %v150 = vpop.f32.mrf.mxu0
    %v151 = vadd.f32 0.0, %v150
    %152 = vmatmul.f32.gmra.mxu0 %v56
    %v153 = vpop.f32.mrf.mxu0
    %v154 = vadd.f32 0.0, %v153
    %155 = vmatmul.f32.gmra.mxu0 %v57
    %v156 = vpop.f32.mrf.mxu0
    %v157 = vadd.f32 0.0, %v156
    %158 = vmatmul.f32.gmra.mxu0 %v58
    %v159 = vpop.f32.mrf.mxu0
    %v160 = vadd.f32 0.0, %v159
    %161 = vmatmul.f32.gmra.mxu0 %v59
    %v162 = vpop.f32.mrf.mxu0
    %v163 = vadd.f32 0.0, %v162
    %164 = vmatmul.f32.gmra.mxu0 %v60
    %v165 = vpop.f32.mrf.mxu0
    %v166 = vadd.f32 0.0, %v165
    %167 = vmatmul.f32.gmra.mxu0 %v61
    %v168 = vpop.f32.mrf.mxu0
    %v169 = vadd.f32 0.0, %v168
    %170 = vmatmul.f32.gmra.mxu0 %v62
    %v171 = vpop.f32.mrf.mxu0
    %v172 = vadd.f32 0.0, %v171
    %173 = vmatmul.f32.gmra.mxu0 %v63
    %v174 = vpop.f32.mrf.mxu0
    %v175 = vadd.f32 0.0, %v174
    %176 = vmatmul.f32.gmra.mxu0 %v64
    %v177 = vpop.f32.mrf.mxu0
    %v178 = vadd.f32 0.0, %v177
    %179 = vmatmul.f32.gmra.mxu0 %v65
    %v180 = vpop.f32.mrf.mxu0
    %v181 = vadd.f32 0.0, %v180
    %182 = vmatmul.f32.gmra.mxu0 %v66
    %v183 = vpop.f32.mrf.mxu0
    %v184 = vadd.f32 0.0, %v183
    %185 = vmatmul.f32.gmra.mxu0 %v67
    %v186 = vpop.f32.mrf.mxu0
    %v187 = vadd.f32 0.0, %v186
    %188 = vmatmul.f32.gmra.mxu0 %v68
    %v189 = vpop.f32.mrf.mxu0
    %v190 = vadd.f32 0.0, %v189
    %191 = vmatmul.f32.gmra.mxu0 %v69
    %v192 = vpop.f32.mrf.mxu0
    %v193 = vadd.f32 0.0, %v192
    %194 = vmatmul.f32.gmra.mxu0 %v70
    %v195 = vpop.f32.mrf.mxu0
    %v196 = vadd.f32 0.0, %v195
    %197 = vmatmul.f32.gmra.mxu0 %v71
    %v198 = vpop.f32.mrf.mxu0
    %v199 = vadd.f32 0.0, %v198
    %200 = vmatmul.f32.gmra.mxu0 %v72
    %v201 = vpop.f32.mrf.mxu0
    %v202 = vadd.f32 0.0, %v201
    %203 = vmatmul.f32.gmra.mxu0 %v73
    %v204 = vpop.f32.mrf.mxu0
    %v205 = vadd.f32 0.0, %v204
    %206 = vmatmul.f32.gmra.mxu0 %v74
    %v207 = vpop.f32.mrf.mxu0
    %v208 = vadd.f32 0.0, %v207
    %209 = vmatmul.f32.gmra.mxu0 %v75
    %v210 = vpop.f32.mrf.mxu0
    %v211 = vadd.f32 0.0, %v210
    %212 = vmatmul.f32.gmra.mxu0 %v76
    %v213 = vpop.f32.mrf.mxu0
    %v214 = vadd.f32 0.0, %v213
    %215 = vmatmul.f32.gmra.mxu0 %v77
    %v216 = vpop.f32.mrf.mxu0
    %v217 = vadd.f32 0.0, %v216
    %218 = vmatmul.f32.gmra.mxu0 %v78
    %v219 = vpop.f32.mrf.mxu0
    %v220 = vadd.f32 0.0, %v219
    %221 = vmatmul.f32.gmra.mxu0 %v79
    %v222 = vpop.f32.mrf.mxu0
    %v223 = vadd.f32 0.0, %v222
    %224 = vdwg.mxu0
    %225 = vmatpush.xpose.msra.mxu0 %v111
    %226 = vmatpush.xpose.msra.mxu0 %v110
    %227 = vmatpush.xpose.msra.mxu0 %v109
    %228 = vmatpush.xpose.msra.mxu0 %v108
    %229 = vmatpush.xpose.msra.mxu0 %v107
    %230 = vmatpush.xpose.msra.mxu0 %v106
    %231 = vmatpush.xpose.msra.mxu0 %v105
    %232 = vmatpush.xpose.msra.mxu0 %v104
    %233 = vmatpush.xpose.msra.mxu0 %v103
    %234 = vmatpush.xpose.msra.mxu0 %v102
    %235 = vmatpush.xpose.msra.mxu0 %v101
    %236 = vmatpush.xpose.msra.mxu0 %v100
    %237 = vmatpush.xpose.msra.mxu0 %v99
    %238 = vmatpush.xpose.msra.mxu0 %v98
    %239 = vmatpush.xpose.msra.mxu0 %v97
    %240 = vmatpush.xpose.msra.mxu0 %v96
    %241 = vmatmul.f32.gmra.mxu0 %v48
    %v242 = vpop.f32.mrf.mxu0
    %v243 = vadd.f32 0.0, %v242
    %244 = vmatmul.f32.gmra.mxu0 %v49
    %v245 = vpop.f32.mrf.mxu0
    %v246 = vadd.f32 0.0, %v245
    %247 = vmatmul.f32.gmra.mxu0 %v50
    %v248 = vpop.f32.mrf.mxu0
    %v249 = vadd.f32 0.0, %v248
    %250 = vmatmul.f32.gmra.mxu0 %v51
    %v251 = vpop.f32.mrf.mxu0
    %v252 = vadd.f32 0.0, %v251
    %253 = vmatmul.f32.gmra.mxu0 %v52
    %v254 = vpop.f32.mrf.mxu0
    %v255 = vadd.f32 0.0, %v254
    %256 = vmatmul.f32.gmra.mxu0 %v53
    %v257 = vpop.f32.mrf.mxu0
    %v258 = vadd.f32 0.0, %v257
    %259 = vmatmul.f32.gmra.mxu0 %v54
    %v260 = vpop.f32.mrf.mxu0
    %v261 = vadd.f32 0.0, %v260
    %262 = vmatmul.f32.gmra.mxu0 %v55
    %v263 = vpop.f32.mrf.mxu0
    %v264 = vadd.f32 0.0, %v263
    %265 = vmatmul.f32.gmra.mxu0 %v56
    %v266 = vpop.f32.mrf.mxu0
    %v267 = vadd.f32 0.0, %v266
    %268 = vmatmul.f32.gmra.mxu0 %v57
    %v269 = vpop.f32.mrf.mxu0
    %v270 = vadd.f32 0.0, %v269
    %271 = vmatmul.f32.gmra.mxu0 %v58
    %v272 = vpop.f32.mrf.mxu0
    %v273 = vadd.f32 0.0, %v272
    %274 = vmatmul.f32.gmra.mxu0 %v59
    %v275 = vpop.f32.mrf.mxu0
    %v276 = vadd.f32 0.0, %v275
    %277 = vmatmul.f32.gmra.mxu0 %v60
    %v278 = vpop.f32.mrf.mxu0
    %v279 = vadd.f32 0.0, %v278
    %280 = vmatmul.f32.gmra.mxu0 %v61
    %v281 = vpop.f32.mrf.mxu0
    %v282 = vadd.f32 0.0, %v281
    %283 = vmatmul.f32.gmra.mxu0 %v62
    %v284 = vpop.f32.mrf.mxu0
    %v285 = vadd.f32 0.0, %v284
    %286 = vmatmul.f32.gmra.mxu0 %v63
    %v287 = vpop.f32.mrf.mxu0
    %v288 = vadd.f32 0.0, %v287
    %289 = vmatmul.f32.gmra.mxu0 %v64
    %v290 = vpop.f32.mrf.mxu0
    %v291 = vadd.f32 0.0, %v290
    %292 = vmatmul.f32.gmra.mxu0 %v65
    %v293 = vpop.f32.mrf.mxu0
    %v294 = vadd.f32 0.0, %v293
    %295 = vmatmul.f32.gmra.mxu0 %v66
    %v296 = vpop.f32.mrf.mxu0
    %v297 = vadd.f32 0.0, %v296
    %298 = vmatmul.f32.gmra.mxu0 %v67
    %v299 = vpop.f32.mrf.mxu0
    %v300 = vadd.f32 0.0, %v299
    %301 = vmatmul.f32.gmra.mxu0 %v68
    %v302 = vpop.f32.mrf.mxu0
    %v303 = vadd.f32 0.0, %v302
    %304 = vmatmul.f32.gmra.mxu0 %v69
    %v305 = vpop.f32.mrf.mxu0
    %v306 = vadd.f32 0.0, %v305
    %307 = vmatmul.f32.gmra.mxu0 %v70
    %v308 = vpop.f32.mrf.mxu0
    %v309 = vadd.f32 0.0, %v308
    %310 = vmatmul.f32.gmra.mxu0 %v71
    %v311 = vpop.f32.mrf.mxu0
    %v312 = vadd.f32 0.0, %v311
    %313 = vmatmul.f32.gmra.mxu0 %v72
    %v314 = vpop.f32.mrf.mxu0
    %v315 = vadd.f32 0.0, %v314
    %316 = vmatmul.f32.gmra.mxu0 %v73
    %v317 = vpop.f32.mrf.mxu0
    %v318 = vadd.f32 0.0, %v317
    %319 = vmatmul.f32.gmra.mxu0 %v74
    %v320 = vpop.f32.mrf.mxu0
    %v321 = vadd.f32 0.0, %v320
    %322 = vmatmul.f32.gmra.mxu0 %v75
    %v323 = vpop.f32.mrf.mxu0
    %v324 = vadd.f32 0.0, %v323
    %325 = vmatmul.f32.gmra.mxu0 %v76
    %v326 = vpop.f32.mrf.mxu0
    %v327 = vadd.f32 0.0, %v326
    %328 = vmatmul.f32.gmra.mxu0 %v77
    %v329 = vpop.f32.mrf.mxu0
    %v330 = vadd.f32 0.0, %v329
    %331 = vmatmul.f32.gmra.mxu0 %v78
    %v332 = vpop.f32.mrf.mxu0
    %v333 = vadd.f32 0.0, %v332
    %334 = vmatmul.f32.gmra.mxu0 %v79
    %v335 = vpop.f32.mrf.mxu0
    %v336 = vadd.f32 0.0, %v335
    %337 = vdwg.mxu0
    %s338 = sld [smem:[#allocation2]]
    %v339 = vstv %s338
    %v340 = vmul.f32 %v130, %v339
    %v341 = vmul.f32 %v243, %v339
    %v342 = vmul.f32 %v133, %v339
    %v343 = vmul.f32 %v246, %v339
    %v344 = vmul.f32 %v136, %v339
    %v345 = vmul.f32 %v249, %v339
    %v346 = vmul.f32 %v139, %v339
    %v347 = vmul.f32 %v252, %v339
    %v348 = vmul.f32 %v142, %v339
    %v349 = vmul.f32 %v255, %v339
    %v350 = vmul.f32 %v145, %v339
    %v351 = vmul.f32 %v258, %v339
    %v352 = vmul.f32 %v148, %v339
    %v353 = vmul.f32 %v261, %v339
    %v354 = vmul.f32 %v151, %v339
    %v355 = vmul.f32 %v264, %v339
    %v356 = vmul.f32 %v154, %v339
    %v357 = vmul.f32 %v267, %v339
    %v358 = vmul.f32 %v157, %v339
    %v359 = vmul.f32 %v270, %v339
    %v360 = vmul.f32 %v160, %v339
    %v361 = vmul.f32 %v273, %v339
    %v362 = vmul.f32 %v163, %v339
    %v363 = vmul.f32 %v276, %v339
    %v364 = vmul.f32 %v166, %v339
    %v365 = vmul.f32 %v279, %v339
    %v366 = vmul.f32 %v169, %v339
    %v367 = vmul.f32 %v282, %v339
    %v368 = vmul.f32 %v172, %v339
    %v369 = vmul.f32 %v285, %v339
    %v370 = vmul.f32 %v175, %v339
    %v371 = vmul.f32 %v288, %v339
    %v372 = vmul.f32 %v178, %v339
    %v373 = vmul.f32 %v291, %v339
    %v374 = vmul.f32 %v181, %v339
    %v375 = vmul.f32 %v294, %v339
    %v376 = vmul.f32 %v184, %v339
    %v377 = vmul.f32 %v297, %v339
    %v378 = vmul.f32 %v187, %v339
    %v379 = vmul.f32 %v300, %v339
    %v380 = vmul.f32 %v190, %v339
    %v381 = vmul.f32 %v303, %v339
    %v382 = vmul.f32 %v193, %v339
    %v383 = vmul.f32 %v306, %v339
    %v384 = vmul.f32 %v196, %v339
    %v385 = vmul.f32 %v309, %v339
    %v386 = vmul.f32 %v199, %v339
    %v387 = vmul.f32 %v312, %v339
    %v388 = vmul.f32 %v202, %v339
    %v389 = vmul.f32 %v315, %v339
    %v390 = vmul.f32 %v205, %v339
    %v391 = vmul.f32 %v318, %v339
    %v392 = vmul.f32 %v208, %v339
    %v393 = vmul.f32 %v321, %v339
    %v394 = vmul.f32 %v211, %v339
    %v395 = vmul.f32 %v324, %v339
    %v396 = vmul.f32 %v214, %v339
    %v397 = vmul.f32 %v327, %v339
    %v398 = vmul.f32 %v217, %v339
    %v399 = vmul.f32 %v330, %v339
    %v400 = vmul.f32 %v220, %v339
    %v401 = vmul.f32 %v333, %v339
    %v402 = vmul.f32 %v223, %v339
    %v403 = vmul.f32 %v336, %v339
    %404 = vst [vmem:[#allocation8] sm:$0xff] %v340
    %405 = vst [vmem:[#allocation8 + $0x8] sm:$0xff] %v341
    %406 = vst [vmem:[#allocation8 + $0x10] sm:$0xff] %v342
    %407 = vst [vmem:[#allocation8 + $0x18] sm:$0xff] %v343
    %408 = vst [vmem:[#allocation8 + $0x20] sm:$0xff] %v344
    %409 = vst [vmem:[#allocation8 + $0x28] sm:$0xff] %v345
    %410 = vst [vmem:[#allocation8 + $0x30] sm:$0xff] %v346
    %411 = vst [vmem:[#allocation8 + $0x38] sm:$0xff] %v347
    %412 = vst [vmem:[#allocation8 + $0x40] sm:$0xff] %v348
    %413 = vst [vmem:[#allocation8 + $0x48] sm:$0xff] %v349
    %414 = vst [vmem:[#allocation8 + $0x50] sm:$0xff] %v350
    %415 = vst [vmem:[#allocation8 + $0x58] sm:$0xff] %v351
    %416 = vst [vmem:[#allocation8 + $0x60] sm:$0xff] %v352
    %417 = vst [vmem:[#allocation8 + $0x68] sm:$0xff] %v353
    %418 = vst [vmem:[#allocation8 + $0x70] sm:$0xff] %v354
    %419 = vst [vmem:[#allocation8 + $0x78] sm:$0xff] %v355
    %420 = vst [vmem:[#allocation8 + $0x80] sm:$0xff] %v356
    %421 = vst [vmem:[#allocation8 + $0x88] sm:$0xff] %v357
    %422 = vst [vmem:[#allocation8 + $0x90] sm:$0xff] %v358
    %423 = vst [vmem:[#allocation8 + $0x98] sm:$0xff] %v359
    %424 = vst [vmem:[#allocation8 + $0xa0] sm:$0xff] %v360
    %425 = vst [vmem:[#allocation8 + $0xa8] sm:$0xff] %v361
    %426 = vst [vmem:[#allocation8 + $0xb0] sm:$0xff] %v362
    %427 = vst [vmem:[#allocation8 + $0xb8] sm:$0xff] %v363
    %428 = vst [vmem:[#allocation8 + $0xc0] sm:$0xff] %v364
    %429 = vst [vmem:[#allocation8 + $0xc8] sm:$0xff] %v365
    %430 = vst [vmem:[#allocation8 + $0xd0] sm:$0xff] %v366
    %431 = vst [vmem:[#allocation8 + $0xd8] sm:$0xff] %v367
    %432 = vst [vmem:[#allocation8 + $0xe0] sm:$0xff] %v368
    %433 = vst [vmem:[#allocation8 + $0xe8] sm:$0xff] %v369
    %434 = vst [vmem:[#allocation8 + $0xf0] sm:$0xff] %v370
    %435 = vst [vmem:[#allocation8 + $0xf8] sm:$0xff] %v371
    %436 = vst [vmem:[#allocation8 + $0x100] sm:$0xff] %v372
    %437 = vst [vmem:[#allocation8 + $0x108] sm:$0xff] %v373
    %438 = vst [vmem:[#allocation8 + $0x110] sm:$0xff] %v374
    %439 = vst [vmem:[#allocation8 + $0x118] sm:$0xff] %v375
    %440 = vst [vmem:[#allocation8 + $0x120] sm:$0xff] %v376
    %441 = vst [vmem:[#allocation8 + $0x128] sm:$0xff] %v377
    %442 = vst [vmem:[#allocation8 + $0x130] sm:$0xff] %v378
    %443 = vst [vmem:[#allocation8 + $0x138] sm:$0xff] %v379
    %444 = vst [vmem:[#allocation8 + $0x140] sm:$0xff] %v380
    %445 = vst [vmem:[#allocation8 + $0x148] sm:$0xff] %v381
    %446 = vst [vmem:[#allocation8 + $0x150] sm:$0xff] %v382
    %447 = vst [vmem:[#allocation8 + $0x158] sm:$0xff] %v383
    %448 = vst [vmem:[#allocation8 + $0x160] sm:$0xff] %v384
    %449 = vst [vmem:[#allocation8 + $0x168] sm:$0xff] %v385
    %450 = vst [vmem:[#allocation8 + $0x170] sm:$0xff] %v386
    %451 = vst [vmem:[#allocation8 + $0x178] sm:$0xff] %v387
    %452 = vst [vmem:[#allocation8 + $0x180] sm:$0xff] %v388
    %453 = vst [vmem:[#allocation8 + $0x188] sm:$0xff] %v389
    %454 = vst [vmem:[#allocation8 + $0x190] sm:$0xff] %v390
    %455 = vst [vmem:[#allocation8 + $0x198] sm:$0xff] %v391
    %456 = vst [vmem:[#allocation8 + $0x1a0] sm:$0xff] %v392
    %457 = vst [vmem:[#allocation8 + $0x1a8] sm:$0xff] %v393
    %458 = vst [vmem:[#allocation8 + $0x1b0] sm:$0xff] %v394
    %459 = vst [vmem:[#allocation8 + $0x1b8] sm:$0xff] %v395
    %460 = vst [vmem:[#allocation8 + $0x1c0] sm:$0xff] %v396
    %461 = vst [vmem:[#allocation8 + $0x1c8] sm:$0xff] %v397
    %462 = vst [vmem:[#allocation8 + $0x1d0] sm:$0xff] %v398
    %463 = vst [vmem:[#allocation8 + $0x1d8] sm:$0xff] %v399
    %464 = vst [vmem:[#allocation8 + $0x1e0] sm:$0xff] %v400
    %465 = vst [vmem:[#allocation8 + $0x1e8] sm:$0xff] %v401
    %466 = vst [vmem:[#allocation8 + $0x1f0] sm:$0xff] %v402
    %467 = vst [vmem:[#allocation8 + $0x1f8] sm:$0xff] %v403
    // Predicated region
    $region22: #{tpu_custom_call.1} parent=1 // pred_check
      _
    $region23: #{tpu_custom_call.1} parent=1 // pred_check_branch
      %469 = sbr.rel (0) target = $region25
    $region24: #{tpu_custom_call.1} parent=1 // pred_region
      %471 = vsyncadd [#allocation5], 0
      %s472 = sshll.u32 [#allocation8], 4
      %s473 = int_to_ptr.vmem [resolvable:$true] %s472
      %s474 = sshll.u32 %s3, 4
      %s475 = int_to_ptr.hbm [resolvable:$true] %s474
      %480 = dma.vmem_to_hbm [thread:$0]  %s473, 8192, %s475, [#allocation5], 256, 256, 16
    $region25: #{tpu_custom_call.1} parent=1 // pred_fallthru
      _
    // Predicated region
    $region26: #{tpu_custom_call.1} parent=1 // pred_check
      _
    $region27: #{tpu_custom_call.1} parent=1 // pred_check_branch
      %482 = sbr.rel (0) target = $region29
    $region28: #{tpu_custom_call.1} parent=1 // pred_region
      %484 = dma.done [#allocation5], 8192
    $region29: #{tpu_custom_call.1} parent=1 // pred_fallthru
      _
    %485 = vsyncpa [#allocation4], 1
    %486 = vsyncpa [#allocation7], 1
    %487 = vsyncpa [#allocation5], 1

</llo_original>
